<compile_context>
chip_gen: v7x
topology: tpu7x:2x2x1
jax: 0.10.0
libtpu: 0.0.40
codegen_flags: <defaults>
</compile_context>

<pallas_src>
import jax
import jax.numpy as jnp
from jax.experimental import pallas as pl
from jax.experimental.pallas import tpu as pltpu


def _gated_kernel_f32(x_ref, o_ref):
    # x_ref: (2, R, 128) stacked halves; o_ref: (R, 128)
    x1 = x_ref[0].astype(jnp.float32)
    x2 = x_ref[1].astype(jnp.float32)
    # sigmoid(x) == 0.5 * (tanh(0.5 * x) + 1): fewer EUP ops than exp-based sigmoid.
    gate = 0.5 * (jnp.tanh(0.5 * x2) + 1.0)
    o_ref[...] = (jnp.tanh(x1) * gate).astype(o_ref.dtype)


def _gated_kernel_native(x_ref, o_ref):
    # Compute in the I/O dtype (bf16 on v6e/v7x): halves EUP pushes, casts and
    # vreg pressure so the kernel stays under the HBM roofline on v7x.
    x1 = x_ref[0]
    x2 = x_ref[1]
    gate = 0.5 * (jnp.tanh(0.5 * x2) + 1.0)
    o_ref[...] = (jnp.tanh(x1) * gate).astype(o_ref.dtype)


def _chip_info():
    """Return (vmem_capacity_bytes, is_v5e) with conservative fallbacks."""
    vmem_bytes = 64 * 2**20  # conservative default (v7x-safe)
    is_v5e = False
    try:
        vmem_bytes = int(pltpu.get_tpu_info().vmem_capacity_bytes)
    except Exception:
        pass
    try:
        kind = jax.devices()[0].device_kind.lower()
        is_v5e = ("v5 lite" in kind) or ("v5e" in kind) or ("v5litepod" in kind)
    except Exception:
        pass
    return vmem_bytes, is_v5e


def _pick_row_tile(rows, itemsize, budget_bytes):
    # Double-buffered working set per step ~= 2 * (2 inputs + 1 output) rows of 128 lanes.
    per_row_bytes = 6 * 128 * itemsize
    cap = budget_bytes // per_row_bytes
    cap = max(8, (cap // 8) * 8)  # sublane-aligned
    if rows <= cap:
        return rows               # full extent: always a legal block
    return int(cap)


def gated_activation(x):
    """x: (N, C, H, W) with C even. Returns tanh(x1) * sigmoid(x2), shape (N, C//2, H, W)."""
    n, c, h, w = x.shape
    assert c % 2 == 0, "channel dim must be even to chunk into 2"
    c_half = c // 2
    half_elems = c_half * h * w
    itemsize = jnp.dtype(x.dtype).itemsize

    vmem_bytes, is_v5e = _chip_info()
    big_vmem = vmem_bytes >= 96 * 2**20          # v5e / v6e (128 MiB VMEM)
    budget = (48 if big_vmem else 24) * 2**20    # double-buffered working-set target
    scoped_cap = (64 if big_vmem else 32) * 2**20

    # Pad the flattened per-half length to a multiple of 128 so every shape takes
    # the lane-dense (rows, 128) fast path (dense DMAs, unmasked stores).
    pad = (-half_elems) % 128
    padded = half_elems + pad
    rows = padded // 128

    x_flat = x.reshape(n, 2, half_elems)
    if pad:
        x_flat = jnp.pad(x_flat, ((0, 0), (0, 0), (0, pad)))
    x_view = x_flat.reshape(n, 2, rows, 128)

    r_tile = _pick_row_tile(rows, itemsize, budget)
    tiles = pl.cdiv(rows, r_tile)

    # Keep the total flattened step count even so both v7x TensorCores get
    # balanced work under ("parallel", "parallel") semantics.
    if (n * tiles) % 2 == 1 and rows >= 16:
        cand = -(-rows // (tiles + 1))
        cand = max(8, ((cand + 7) // 8) * 8)
        if cand < rows and (n * pl.cdiv(rows, cand)) % 2 == 0:
            r_tile = cand
            tiles = pl.cdiv(rows, r_tile)

    # bf16 compute only on chips with bf16 VPU/EUP (v6e / v7x); f32 otherwise.
    use_native = (x.dtype == jnp.bfloat16) and not is_v5e
    kernel = _gated_kernel_native if use_native else _gated_kernel_f32

    block_set_bytes = 3 * r_tile * 128 * itemsize
    vmem_limit = int(min(max(16 * 2**20, 4 * block_set_bytes), scoped_cap))

    total = n * half_elems
    cost = pl.CostEstimate(
        flops=int(7 * total),
        transcendentals=int(2 * total),
        bytes_accessed=int(3 * total * itemsize),
    )

    out = pl.pallas_call(
        kernel,
        out_shape=jax.ShapeDtypeStruct((n, rows, 128), x.dtype),
        grid_spec=pltpu.PrefetchScalarGridSpec(
            num_scalar_prefetch=0,
            grid=(n, tiles),
            in_specs=[pl.BlockSpec((pl.Squeezed(), 2, r_tile, 128),
                                   lambda i, j: (i, 0, j, 0))],
            out_specs=pl.BlockSpec((pl.Squeezed(), r_tile, 128),
                                   lambda i, j: (i, j, 0)),
        ),
        compiler_params=pltpu.CompilerParams(
            dimension_semantics=("parallel", "parallel"),
            vmem_limit_bytes=vmem_limit,
        ),
        cost_estimate=cost,
    )(x_view)

    out_flat = out.reshape(n, padded)
    if pad:
        out_flat = out_flat[:, :half_elems]
    return out_flat.reshape(n, c_half, h, w)


if __name__ == "__main__":
    key = jax.random.PRNGKey(0)
    # NCHW input with an even channel count (as implied by chunk(x, 2, dim=1)).
    x = jax.random.normal(key, (2, 8, 16, 16), dtype=jnp.float32)

    y = jax.block_until_ready(gated_activation(x))

    # Reference check against plain JAX (same semantics as the PyTorch module).
    x1, x2 = jnp.split(x, 2, axis=1)
    y_ref = jnp.tanh(x1) * jax.nn.sigmoid(x2)
    assert y.shape == (2, 4, 16, 16)
    assert jnp.allclose(y, y_ref, atol=1e-5, rtol=1e-5)

    print("KERNEL_OK")
</pallas_src>

<mosaic_0001>
module attributes {stable_mosaic.version = 11 : i64} {
  func.func @_gated_kernel_f32(%arg0: i32, %arg1: i32, %arg2: memref<1x2x8x128xf32, #tpu.memory_space<vmem>>, %arg3: memref<1x8x128xf32, #tpu.memory_space<vmem>>) attributes {dimension_semantics = [#tpu.dimension_semantics<parallel>, #tpu.dimension_semantics<parallel>], iteration_bounds = array<i64: 2, 1>, scalar_prefetch = 0 : i64, scratch_operands = 0 : i64, tpu.core_type = #tpu.core_type<tc>, window_params = [{transform_indices = @transform_0, window_bounds = array<i64: 1, 2, 8, 128>}, {transform_indices = @transform_1, window_bounds = array<i64: 1, 8, 128>}]} {
    %c0 = arith.constant 0 : index
    %c0_0 = arith.constant 0 : index
    %c0_1 = arith.constant 0 : index
    %c0_2 = arith.constant 0 : index
    %0 = vector.load %arg2[%c0, %c0_0, %c0_1, %c0_2] : memref<1x2x8x128xf32, #tpu.memory_space<vmem>>, vector<1x1x8x128xf32>
    %1 = vector.shape_cast %0 : vector<1x1x8x128xf32> to vector<8x128xf32>
    %c0_3 = arith.constant 0 : index
    %c1 = arith.constant 1 : index
    %c0_4 = arith.constant 0 : index
    %c0_5 = arith.constant 0 : index
    %2 = vector.load %arg2[%c0_3, %c1, %c0_4, %c0_5] : memref<1x2x8x128xf32, #tpu.memory_space<vmem>>, vector<1x1x8x128xf32>
    %3 = vector.shape_cast %2 : vector<1x1x8x128xf32> to vector<8x128xf32>
    %cst = arith.constant 5.000000e-01 : f32
    %4 = vector.broadcast %cst : f32 to vector<8x128xf32>
    %5 = arith.mulf %4, %3 : vector<8x128xf32>
    %6 = math.tanh %5 : vector<8x128xf32>
    %cst_6 = arith.constant 1.000000e+00 : f32
    %7 = vector.broadcast %cst_6 : f32 to vector<8x128xf32>
    %8 = arith.addf %6, %7 : vector<8x128xf32>
    %cst_7 = arith.constant 5.000000e-01 : f32
    %9 = vector.broadcast %cst_7 : f32 to vector<8x128xf32>
    %10 = arith.mulf %9, %8 : vector<8x128xf32>
    %11 = math.tanh %1 : vector<8x128xf32>
    %12 = arith.mulf %11, %10 : vector<8x128xf32>
    %c0_8 = arith.constant 0 : index
    %c0_9 = arith.constant 0 : index
    %c0_10 = arith.constant 0 : index
    %13 = vector.load %arg3[%c0_8, %c0_9, %c0_10] : memref<1x8x128xf32, #tpu.memory_space<vmem>>, vector<1x8x128xf32>
    %14 = vector.shape_cast %13 : vector<1x8x128xf32> to vector<8x128xf32>
    %15 = vector.shape_cast %12 : vector<8x128xf32> to vector<1x8x128xf32>
    tpu.vector_store %arg3[%c0_8, %c0_9, %c0_10], %15 {strides = array<i32>} : memref<1x8x128xf32, #tpu.memory_space<vmem>>, vector<1x8x128xf32>,
    return
  }
  func.func @transform_0(%arg0: i32, %arg1: i32) -> (i32, i32, i32, i32) {
    %c0_i32 = arith.constant 0 : i32
    %c0_i32_0 = arith.constant 0 : i32
    %c0_i32_1 = arith.constant 0 : i32
    return %arg0, %c0_i32, %arg1, %c0_i32_0 : i32, i32, i32, i32
  }
  func.func @transform_1(%arg0: i32, %arg1: i32) -> (i32, i32, i32) {
    %c0_i32 = arith.constant 0 : i32
    %c0_i32_0 = arith.constant 0 : i32
    return %arg0, %arg1, %c0_i32 : i32, i32, i32
  }
}

</mosaic_0001>

<llo_original>
// kernel: tpu_custom_call.1
$region0: #{tpu_custom_call.1}
  #allocation0 [shape = 'u32[]', space=smem, size = 0x4, offset = 0x4, fixed_abs, tag = 'smem constant byte address 0x4 - core index']
  #allocation1 [shape = 'u32[144,128]{1,0:T(1,128)}', space=vmem, size = 0x12000, scoped, tag = 'internal scratch']
  %s0 = inlined_call_operand.hbm [shape: f32[2,2,8,128], index: 0, kind: input, shape index: {}]
  %s1 = inlined_call_operand.hbm [shape: f32[2,8,128], index: 1, kind: output, shape index: {}]
  %s2 = sld [smem:[#allocation0]]
  $region41: #{tpu_custom_call.1} parent=0
    _
  %s4 = ssub.s32 1, %s2
  %s5 = scalar_select 0, %s4, %s2
  $region1: #{tpu_custom_call.1} parent=0
    #allocation2 [shape = 'u8[16384]{0}', space=vmem, size = 0x4000, scoped, tag = 'input window, operand 0']
    #allocation3 [shape = 's32[2]{0}', space=sflag, size = 0x8, scoped, tag = 'scoped memory for tpu_custom_call.1']
    #allocation4 [shape = 's32[2]{0}', space=sflag, size = 0x8, scoped, tag = 'scoped memory for tpu_custom_call.1']
    #allocation5 [shape = 'u8[8192]{0}', space=vmem, size = 0x2000, scoped, tag = 'output window, operand 0']
    %6 = vsyncpa [#allocation3], 0
    %s7 = scalar_lea.sflag [#allocation3], 1
    %8 = vsyncpa %s7, 0
    %9 = vsyncpa [#allocation4], 0
    %s10 = scalar_lea.sflag [#allocation4], 1
    %11 = vsyncpa %s10, 0
    loop: start=0, step=1, limit=4
    $region2: #{tpu_custom_call.1} parent=1 // loop_pre_header
      _
    $region3: #{tpu_custom_call.1} parent=1 // loop_header
      %s13 = sphi 0, %s17
      %p14 = scmp.ge.s32.totalorder %s13, 4
      %s20 = sphi 0, %s32
      %s21 = sphi 0, %s28
      %s22 = sphi 0, %s20
      %s23 = sphi 0, %s21
      %s24 = sphi 0, %s22
      %s25 = sphi 0, %s23
      %s37 = sphi 0, %s39
      %s40 = sphi 0, %s37
      %s41 = sphi 0, %s40
      %s57 = sphi 0, %s41
      %s65 = sphi 0, %s67
      %s68 = sphi 0, %s65
      %s69 = sphi 0, %s68
      %s85 = sphi 0, %s69
    $region4: #{tpu_custom_call.1} parent=1 // loop_header_branch
      %16 = sbr.rel (%p14) target = $region8
    $region5: #{tpu_custom_call.1} parent=1 // loop_body
      %s18 = ssub.s32 %s13, 1
      %s19 = ssub.s32 %s13, 2
      %s26 = sadd.s32 1, %s21
      %p27 = scmp.ge.s32.totalorder %s26, 1
      %s28 = scalar_select %p27, 0, %s26
      %s29 = sadd.s32 1, %s20
      %s30 = scalar_select %p27, %s29, %s20
      %p31 = scmp.ge.s32.totalorder %s30, 2
      %s32 = scalar_select %p31, 0, %s30
      %s33 = ssub.s32 %s20, %s32
      %s34 = ssub.s32 %s21, %s28
      %s35 = sor.u32 %s33, %s34
      %p36 = scmp.eq.s32.totalorder %s35, 0
      %s38 = sadd.s32 %s37, 1
      %s39 = scalar_select %p36, %s37, %s38
      %p42 = pneg %p36
      %p43 = scmp.eq.s32.totalorder %s13, 1
      %p44 = por %p42, %p43
      %p45 = scmp.ne.s32.totalorder %s37, %s40
      %p46 = scmp.eq.s32.totalorder %s13, 0
      %p47 = por %p45, %p46
      %p48 = scmp.ne.s32.totalorder %s37, %s40
      %p49 = scmp.eq.s32.totalorder %s18, 1
      %p50 = por %p48, %p49
      %p51 = scmp.ne.s32.totalorder %s40, %s41
      %p52 = scmp.eq.s32.totalorder %s18, 0
      %p53 = por %p51, %p52
      %p54 = scmp.ne.s32.totalorder %s40, %s41
      %p55 = scmp.eq.s32.totalorder %s19, 1
      %p56 = por %p54, %p55
      %p58 = scmp.ne.s32.totalorder %s41, %s57
      %p59 = scmp.eq.s32.totalorder %s19, 0
      %p60 = por %p58, %p59
      %s61 = ssub.s32 %s20, %s32
      %s62 = ssub.s32 %s21, %s28
      %s63 = sor.u32 %s61, %s62
      %p64 = scmp.eq.s32.totalorder %s63, 0
      %s66 = sadd.s32 %s65, 1
      %s67 = scalar_select %p64, %s65, %s66
      %p70 = pneg %p64
      %p71 = scmp.eq.s32.totalorder %s13, 1
      %p72 = por %p70, %p71
      %p73 = scmp.ne.s32.totalorder %s65, %s68
      %p74 = scmp.eq.s32.totalorder %s13, 0
      %p75 = por %p73, %p74
      %p76 = scmp.ne.s32.totalorder %s65, %s68
      %p77 = scmp.eq.s32.totalorder %s18, 1
      %p78 = por %p76, %p77
      %p79 = scmp.ne.s32.totalorder %s68, %s69
      %p80 = scmp.eq.s32.totalorder %s18, 0
      %p81 = por %p79, %p80
      %p82 = scmp.ne.s32.totalorder %s68, %s69
      %p83 = scmp.eq.s32.totalorder %s19, 1
      %p84 = por %p82, %p83
      %p86 = scmp.ne.s32.totalorder %s69, %s85
      %p87 = scmp.eq.s32.totalorder %s19, 0
      %p88 = por %p86, %p87
      %p89 = scmp.le.s32.totalorder 1, %s13
      %p90 = scmp.lt.s32.totalorder %s13, 3
      %p91 = pnand %p89, %p90
      %p92 = pneg %p91
      // Predicated region
      $region9: #{tpu_custom_call.1} parent=5 // pred_check
        _
      $region10: #{tpu_custom_call.1} parent=5 // pred_check_branch
        %94 = sbr.rel (%p91) target = $region12
      $region11: #{tpu_custom_call.1} parent=5 // pred_region
        %s95 = ssub.s32 %s13, 1
      $region12: #{tpu_custom_call.1} parent=5 // pred_fallthru
        _
      %p96 = scmp.lt.s32.totalorder %s13, 2
      // Predicated region
      $region13: #{tpu_custom_call.1} parent=5 // pred_check
        %p97 = pneg %p96
      $region14: #{tpu_custom_call.1} parent=5 // pred_check_branch
        %99 = sbr.rel (%p97) target = $region16
      $region15: #{tpu_custom_call.1} parent=5 // pred_region
        // Predicated region
        $region17: #{tpu_custom_call.1} parent=15 // pred_check
          %p100 = pneg %p47
        $region18: #{tpu_custom_call.1} parent=15 // pred_check_branch
          %102 = sbr.rel (%p100) target = $region20
        $region19: #{tpu_custom_call.1} parent=15 // pred_region
          %s103 = sand.u32 %s37, 1
          %s104 = scalar_lea.sflag [#allocation3], %s103
          %s105 = sand.u32 %s37, 1
          %s106 = smul.addr %s105, 16
          %s107 = scalar_lea.vmem [#allocation2], %s106
          %s109 = ssub.s32 256, 256
          %110 = vsyncadd %s104, %s109
          %s111 = smul.addr %s20, 2
          %s112 = sadd.s32 %s21, %s111
          %s113 = smul.addr %s112, 128
          %s114 = scalar_lea.hbm %s0, %s113
          %s115 = sshll.u32 %s107, 4
          %s116 = int_to_ptr.vmem [resolvable:$true] %s115
          %121 = dma.hbm_to_vmem [thread:$0]  %s114, 256, %s116, %s104, 128, 128, 8
        $region20: #{tpu_custom_call.1} parent=15 // pred_fallthru
          _
      $region16: #{tpu_custom_call.1} parent=5 // pred_fallthru
        _
      %p122 = scmp.le.s32.totalorder 1, %s13
      %p123 = scmp.lt.s32.totalorder %s13, 3
      %p124 = pnand %p122, %p123
      %p125 = pneg %p124
      // Predicated region
      $region21: #{tpu_custom_call.1} parent=5 // pred_check
        _
      $region22: #{tpu_custom_call.1} parent=5 // pred_check_branch
        %127 = sbr.rel (%p124) target = $region24
      $region23: #{tpu_custom_call.1} parent=5 // pred_region
        %s128 = ssub.s32 %s13, 1
        %s129 = sand.u32 %s40, 1
        %s130 = scalar_lea.sflag [#allocation3], %s129
        %s131 = sand.u32 %s40, 1
        %s132 = smul.addr %s131, 16
        %s133 = scalar_lea.vmem [#allocation2], %s132
        // Predicated region
        $region25: #{tpu_custom_call.1} parent=23 // pred_check
          %p134 = pneg %p53
        $region26: #{tpu_custom_call.1} parent=23 // pred_check_branch
          %136 = sbr.rel (%p134) target = $region28
        $region27: #{tpu_custom_call.1} parent=23 // pred_region
          %137 = dma.done %s130, 256
        $region28: #{tpu_custom_call.1} parent=23 // pred_fallthru
          _
        %s138 = sand.u32 %s40, 1
        %s139 = scalar_lea.sflag [#allocation3], %s138
        %s140 = sand.u32 %s40, 1
        %s141 = smul.addr %s140, 16
        %s142 = scalar_lea.vmem [#allocation2], %s141
        %p143 = pneg %p53
        %p144 = pneg %p50
        %p145 = pneg %p81
        %p146 = pneg %p78
        %s147 = sand.u32 %s68, 1
        %s148 = scalar_lea.sflag [#allocation4], %s147
        %s149 = sand.u32 %s68, 1
        %s150 = smul.addr %s149, 8
        %s151 = scalar_lea.vmem [#allocation5], %s150
        %v152 = vld [vmem:[%s133] sm:$0xff]
        %s153 = scalar_lea.vmem %s133, 8 [#allocation2]
        %v154 = vld [vmem:[%s153] sm:$0xff]
        %v155 = vmul.f32 %v154, 0.5
        %v156 = vtanh.pop %v155
        %v157 = vadd.f32 %v156, 1.0
        %v158 = vmul.f32 %v157, 0.5
        %v159 = vtanh.pop %v152
        %v160 = vmul.f32 %v159, %v158
        %161 = vst [vmem:[%s151] sm:$0xff] %v160
        %s162 = sand.u32 %s68, 1
        %s163 = scalar_lea.sflag [#allocation4], %s162
        %s164 = sand.u32 %s68, 1
        %s165 = smul.addr %s164, 8
        %s166 = scalar_lea.vmem [#allocation5], %s165
        // Predicated region
        $region29: #{tpu_custom_call.1} parent=23 // pred_check
          %p167 = pneg %p78
        $region30: #{tpu_custom_call.1} parent=23 // pred_check_branch
          %169 = sbr.rel (%p167) target = $region32
        $region31: #{tpu_custom_call.1} parent=23 // pred_region
          %s171 = ssub.s32 128, 128
          %172 = vsyncadd %s163, %s171
          %s173 = sadd.s32 %s23, %s22
          %s174 = smul.addr %s173, 128
          %s175 = scalar_lea.hbm %s1, %s174
          %s177 = sshll.u32 %s166, 4
          %s178 = int_to_ptr.vmem [resolvable:$true] %s177
          %180 = dma.vmem_to_hbm [thread:$0]  %s178, 128, %s175, %s163
        $region32: #{tpu_custom_call.1} parent=23 // pred_fallthru
          _
      $region24: #{tpu_custom_call.1} parent=5 // pred_fallthru
        _
      %p181 = scmp.le.s32.totalorder 2, %s13
      // Predicated region
      $region33: #{tpu_custom_call.1} parent=5 // pred_check
        %p182 = pneg %p181
      $region34: #{tpu_custom_call.1} parent=5 // pred_check_branch
        %184 = sbr.rel (%p182) target = $region36
      $region35: #{tpu_custom_call.1} parent=5 // pred_region
        %s185 = ssub.s32 %s13, 2
        // Predicated region
        $region37: #{tpu_custom_call.1} parent=35 // pred_check
          %p186 = pneg %p84
        $region38: #{tpu_custom_call.1} parent=35 // pred_check_branch
          %188 = sbr.rel (%p186) target = $region40
        $region39: #{tpu_custom_call.1} parent=35 // pred_region
          %s189 = sand.u32 %s69, 1
          %s190 = scalar_lea.sflag [#allocation4], %s189
          %s191 = sand.u32 %s69, 1
          %s192 = smul.addr %s191, 8
          %s193 = scalar_lea.vmem [#allocation5], %s192
          %194 = dma.done %s190, 128
        $region40: #{tpu_custom_call.1} parent=35 // pred_fallthru
          _
      $region36: #{tpu_custom_call.1} parent=5 // pred_fallthru
        _
    $region6: #{tpu_custom_call.1} parent=1 // loop_footer
      %s17 = sadd.s32 1, %s13
    $region7: #{tpu_custom_call.1} parent=1 // loop_footer_branch
      %12 = sbr.rel target = $region3
    $region8: #{tpu_custom_call.1} parent=1 // loop_exit
      _
    %195 = vsyncpa [#allocation3], 1
    %s196 = scalar_lea.sflag [#allocation3], 1
    %197 = vsyncpa %s196, 1
    %198 = vsyncpa [#allocation4], 1
    %s199 = scalar_lea.sflag [#allocation4], 1
    %200 = vsyncpa %s199, 1

</llo_original>
